<compile_context>
chip_gen: v7x
topology: tpu7x:2x2x1
jax: 0.10.0
libtpu: 0.0.40
codegen_flags: <defaults>
</compile_context>

<pallas_src>
import functools

import jax
import jax.numpy as jnp
from jax import lax
from jax.experimental import pallas as pl
from jax.experimental.pallas import tpu as pltpu


# acc_ref rows (a single (8, TT) f32 scratch, sublane-aligned):
#   0: sum over valid positions of sum_c log p        (per lane, across time)
#   1: sum over valid positions of -log p[target]     (per lane, across time)
#   2: valid-position count                           (per lane, across time)
#   3: running max over classes            (per lane, within current time tile)
#   4: running sum of exp(x - max)         (per lane, within current time tile)
#   5: running sum of raw logits           (per lane, within current time tile)
#   6: picked raw logit x[target]          (per lane, within current time tile)
#   7: unused (padding to 8 sublanes)


def _lsce_kernel(logits_ref, target_ref, out_ref, acc_ref, cid_ref, *,
                 ignore_index, c_total, t_total):
    # logits_ref: (1, TC, TT) block of (B, C, T), class dim on sublanes
    # target_ref: (1, 1, TT) int32, lane-dense
    # out_ref   : (1, 1, 3) f32 SMEM — per-batch-row partials, written once
    # acc_ref   : (8, TT) f32 VMEM scratch (rows documented above)
    # cid_ref   : (TC, TT) int32 VMEM scratch — hoisted class-id iota
    ti = pl.program_id(1)
    kc = pl.program_id(2)
    n_ti = pl.num_programs(1)
    n_kc = pl.num_programs(2)
    tc = logits_ref.shape[1]
    tt = logits_ref.shape[2]

    # ---- once per batch row: reset across-time partials, fill class iota ----
    @pl.when(jnp.logical_and(ti == 0, kc == 0))
    def _init_batch():
        acc_ref[0:3, :] = jnp.zeros((3, tt), jnp.float32)
        cid_ref[...] = lax.broadcasted_iota(jnp.int32, (tc, tt), 0)

    # ---- once per time tile: reset online-softmax running state ----
    @pl.when(kc == 0)
    def _init_pos():
        acc_ref[3:4, :] = jnp.full((1, tt), -jnp.inf, jnp.float32)
        acc_ref[4:7, :] = jnp.zeros((3, tt), jnp.float32)

    x = logits_ref[0].astype(jnp.float32)                 # (TC, TT)
    t = target_ref[0]                                     # (1, TT) int32
    t_loc = t - kc * tc                                   # target id local to this class tile

    # Online-softmax update over the class (sublane) axis.  No tail masking of
    # x here: garbage lanes stay contained per-lane and are excluded below.
    m_old = acc_ref[3:4, :]
    m_new = jnp.maximum(m_old, jnp.max(x, axis=0, keepdims=True))
    acc_ref[3:4, :] = m_new
    acc_ref[4:5, :] = (acc_ref[4:5, :] * jnp.exp(m_old - m_new)
                       + jnp.sum(jnp.exp(x - m_new), axis=0, keepdims=True))
    acc_ref[5:6, :] += jnp.sum(x, axis=0, keepdims=True)
    acc_ref[6:7, :] += jnp.sum(jnp.where(cid_ref[...] == t_loc, x, 0.0),
                               axis=0, keepdims=True)

    # ---- end of class loop for this time tile: fold into per-lane partials ----
    @pl.when(kc == n_kc - 1)
    def _finalize_pos():
        lse = acc_ref[3:4, :] + jnp.log(acc_ref[4:5, :])          # (1, TT)
        sum_logp = acc_ref[5:6, :] - float(c_total) * lse         # sum_c log p
        nll = lse - acc_ref[6:7, :]                               # -log p[target]
        pos = ti * tt + lax.broadcasted_iota(jnp.int32, (1, tt), 1)
        valid = jnp.logical_and(pos < t_total, t != ignore_index)
        # Lane-level where (not multiply) so NaN/Inf from edge-padded garbage
        # never reaches the accumulator.
        acc_ref[0:1, :] += jnp.where(valid, sum_logp, 0.0)
        acc_ref[1:2, :] += jnp.where(valid, nll, 0.0)
        acc_ref[2:3, :] += jnp.where(valid, 1.0, 0.0)

    # ---- end of this batch row: cross-lane reduce, emit 3 scalars ----
    @pl.when(jnp.logical_and(ti == n_ti - 1, kc == n_kc - 1))
    def _finalize_batch():
        out_ref[0, 0, 0] = jnp.sum(acc_ref[0:1, :])   # sum_c log p over valid rows
        out_ref[0, 0, 1] = jnp.sum(acc_ref[1:2, :])   # nll sum over valid rows
        out_ref[0, 0, 2] = jnp.sum(acc_ref[2:3, :])   # valid-row count


def _vmem_capacity_bytes():
    try:
        info = pltpu.get_tpu_info()
        cap = getattr(info, "vmem_capacity_bytes", None)
        if cap:
            return int(cap)
    except Exception:
        pass
    return 64 << 20  # conservative fallback (v7x per-TC VMEM)


def _choose_tiles(C, T, itemsize, budget_bytes):
    """Pick (class_tile, time_tile).

    Per-element tile cost ~= 2*itemsize (double-buffered input) + 4 (class-id
    scratch) + ~16 bytes of live f32 temporaries.
    """
    per_elem = 2 * itemsize + 20
    tt_cap = 8192

    # First try keeping the whole class axis in one block.
    tt_fit = budget_bytes // max(1, C * per_elem)
    if tt_fit >= min(T, 128):
        if tt_fit >= T:
            return C, T                                   # full-dim block is always legal
        return C, min((tt_fit // 128) * 128, tt_cap)

    # Class axis needs tiling: lane-width time tile, largest class tile that
    # fits, divides C, and is a multiple of 8.
    tt = T if T < 128 else 128
    tc_max = budget_bytes // max(1, tt * per_elem)
    if tc_max >= C:
        return C, tt
    tc_best = None
    d = 8
    limit = min(C - 1, tc_max)
    while d <= limit:
        if C % d == 0:
            tc_best = d
        d += 8
    if tc_best is None:
        # TODO(synk): pad the class axis instead of falling back to one block.
        tc_best = C
    return tc_best, tt


def label_smoothing_cross_entropy(output, target, *, eps=0.1, reduction="mean",
                                  ignore_index=-100, tt=None, tc=None):
    """output: (B, C, T) logits (f32 or bf16); target: (B, T) int. Scalar f32 loss."""
    if reduction not in ("mean", "sum"):
        raise ValueError(f"unsupported reduction: {reduction!r}")
    B, C, T = output.shape
    tgt = target.reshape(B, 1, T).astype(jnp.int32)
    itemsize = jnp.dtype(output.dtype).itemsize
    n_total = B * T

    # Generation-aware scoped-VMEM target.
    vmem_cap = _vmem_capacity_bytes()
    if vmem_cap <= (64 << 20):                    # v7x-class: leave headroom
        vmem_target = int(0.62 * vmem_cap)
    else:                                         # v5e/v6e: use the larger VMEM
        vmem_target = min(96 << 20, int(0.75 * vmem_cap))

    auto_tc, auto_tt = _choose_tiles(C, T, itemsize, int(0.6 * vmem_target))
    if tt is None:
        tt = auto_tt
    if tc is None:
        tc = auto_tc
    tt = min(int(tt), T)
    tc = min(int(tc), C)
    if C % tc != 0 or not (tc == C or tc % 8 == 0):
        raise ValueError(f"class tile {tc} must divide C={C} and be a multiple "
                         f"of 8 (or equal C)")

    grid = (B, pl.cdiv(T, tt), pl.cdiv(C, tc))

    kernel = functools.partial(
        _lsce_kernel, ignore_index=int(ignore_index), c_total=C, t_total=T)

    cost = pl.CostEstimate(
        flops=7 * n_total * C,
        transcendentals=n_total * C,
        bytes_accessed=n_total * C * itemsize + n_total * 4 + B * 12,
    )

    parts = pl.pallas_call(
        kernel,
        out_shape=jax.ShapeDtypeStruct((B, 1, 3), jnp.float32),
        grid_spec=pltpu.PrefetchScalarGridSpec(
            num_scalar_prefetch=0,
            grid=grid,
            in_specs=[
                pl.BlockSpec((1, tc, tt), lambda b, ti, kc: (b, kc, ti)),  # logits
                pl.BlockSpec((1, 1, tt), lambda b, ti, kc: (b, 0, ti)),    # targets
            ],
            out_specs=pl.BlockSpec((1, 1, 3), lambda b, ti, kc: (b, 0, 0),
                                   memory_space=pltpu.SMEM),
            scratch_shapes=[
                pltpu.VMEM((8, tt), jnp.float32),    # accumulators / online state
                pltpu.VMEM((tc, tt), jnp.int32),     # hoisted class-id iota
            ],
        ),
        compiler_params=pltpu.CompilerParams(
            # Batch axis parallel -> both v7x TensorCores; time/class reductions
            # stay sequential (per-core scratch accumulators).
            dimension_semantics=("parallel", "arbitrary", "arbitrary"),
            vmem_limit_bytes=int(vmem_target),
        ),
        cost_estimate=cost,
    )(output, tgt)

    # Tiny wrapper-side combine of the per-batch-row partials.
    parts = parts.reshape(B, 3)
    smooth_sum = -jnp.sum(parts[:, 0])
    nll_sum = jnp.sum(parts[:, 1])
    n_valid = jnp.sum(parts[:, 2])
    if reduction == "sum":
        smooth, nll = smooth_sum, nll_sum
    else:  # 'mean': smooth term averages over ALL rows, NLL over valid rows
        smooth = smooth_sum / jnp.float32(n_total)
        nll = nll_sum / jnp.maximum(n_valid, 1.0)
    return smooth * (eps / C) + (1.0 - eps) * nll


def _reference(output, target, eps=0.1, reduction="mean", ignore_index=-100):
    """Pure-JAX reference mirroring the PyTorch forward exactly."""
    B, C, T = output.shape
    pred = jnp.transpose(output, (0, 2, 1)).reshape(-1, C).astype(jnp.float32)
    tgt = target.reshape(-1)
    logp = jax.nn.log_softmax(pred, axis=-1)
    valid = (tgt != ignore_index)
    logp = logp * valid[:, None].astype(logp.dtype)
    if reduction == "sum":
        smooth = -logp.sum()
    else:
        smooth = (-logp.sum(axis=-1)).mean()
    picked = jnp.take_along_axis(logp, jnp.clip(tgt, 0, C - 1)[:, None], axis=-1)[:, 0]
    nll_rows = -picked * valid.astype(logp.dtype)
    if reduction == "sum":
        nll = nll_rows.sum()
    else:
        nll = nll_rows.sum() / jnp.maximum(valid.sum().astype(jnp.float32), 1.0)
    return smooth * eps / C + (1 - eps) * nll


if __name__ == "__main__":
    key = jax.random.PRNGKey(0)
    k1, k2 = jax.random.split(key)

    B, C, T = 2, 32, 200          # batch, num classes, sequence length
    logits = jax.random.normal(k1, (B, C, T), dtype=jnp.float32)
    target = jax.random.randint(k2, (B, T), 0, C, dtype=jnp.int32)
    # Mark a couple of positions as ignored.
    target = target.at[0, 0].set(-100).at[1, 3].set(-100)

    for reduction in ("mean", "sum"):
        ref = _reference(logits, target, eps=0.1, reduction=reduction,
                         ignore_index=-100)
        # (a) auto tiles: single class block, tt == T (grid = (B, 1, 1)).
        loss_auto = label_smoothing_cross_entropy(
            logits, target, eps=0.1, reduction=reduction, ignore_index=-100)
        # (b) forced tiling: tt=128 exercises tail-lane masking (200 % 128 != 0)
        #     and tc=8 exercises the online-softmax class loop (grid (2, 2, 4)).
        loss_tiled = label_smoothing_cross_entropy(
            logits, target, eps=0.1, reduction=reduction, ignore_index=-100,
            tt=128, tc=8)
        for loss in (loss_auto, loss_tiled):
            loss = jax.block_until_ready(loss)
            assert jnp.allclose(loss, ref, rtol=1e-4, atol=1e-3), (reduction, loss, ref)

    # bf16 logits path (cast to f32 inside the kernel).
    logits_bf16 = logits.astype(jnp.bfloat16)
    loss_bf = label_smoothing_cross_entropy(
        logits_bf16, target, eps=0.1, reduction="mean", ignore_index=-100,
        tt=128, tc=8)
    loss_bf = jax.block_until_ready(loss_bf)
    ref_bf = _reference(logits_bf16.astype(jnp.float32), target, eps=0.1,
                        reduction="mean", ignore_index=-100)
    assert jnp.allclose(loss_bf, ref_bf, rtol=5e-3, atol=5e-3), (loss_bf, ref_bf)

    print("KERNEL_OK")
</pallas_src>

<mosaic_0001>
module attributes {stable_mosaic.version = 11 : i64} {
  func.func @_lsce_kernel(%arg0: i32, %arg1: i32, %arg2: i32, %arg3: memref<1x32x200xf32, #tpu.memory_space<vmem>>, %arg4: memref<1x1x200xi32, #tpu.memory_space<vmem>>, %arg5: memref<1x1x3xf32, #tpu.memory_space<smem>>, %arg6: memref<8x200xf32, #tpu.memory_space<vmem>>, %arg7: memref<32x200xi32, #tpu.memory_space<vmem>>) attributes {dimension_semantics = [#tpu.dimension_semantics<parallel>, #tpu.dimension_semantics<arbitrary>, #tpu.dimension_semantics<arbitrary>], iteration_bounds = array<i64: 2, 1, 1>, scalar_prefetch = 0 : i64, scratch_operands = 2 : i64, tpu.core_type = #tpu.core_type<tc>, window_params = [{transform_indices = @transform_0, window_bounds = array<i64: 1, 32, 200>}, {transform_indices = @transform_1, window_bounds = array<i64: 1, 1, 200>}, {transform_indices = @transform_2, window_bounds = array<i64: 1, 1, 3>}]} {
    %c0_i32 = arith.constant 0 : i32
    %0 = arith.cmpi eq, %arg1, %c0_i32 : i32
    %c0_i32_0 = arith.constant 0 : i32
    %1 = arith.cmpi eq, %arg2, %c0_i32_0 : i32
    %2 = arith.andi %0, %1 : i1
    %3 = arith.extui %2 : i1 to i32
    %c0_i32_1 = arith.constant 0 : i32
    %4 = arith.cmpi ne, %3, %c0_i32_1 : i32
    scf.if %4 {
      %cst_32 = arith.constant 0.000000e+00 : f32
      %54 = vector.broadcast %cst_32 : f32 to vector<3x200xf32>
      %c0_33 = arith.constant 0 : index
      %c0_34 = arith.constant 0 : index
      %55 = vector.load %arg6[%c0_33, %c0_34] : memref<8x200xf32, #tpu.memory_space<vmem>>, vector<3x200xf32>
      tpu.vector_store %arg6[%c0_33, %c0_34], %54 {strides = array<i32>} : memref<8x200xf32, #tpu.memory_space<vmem>>, vector<3x200xf32>,
      %56 = tpu.iota {dimensions = array<i32: 0>} : vector<32x200xi32>
      %c0_35 = arith.constant 0 : index
      %c0_36 = arith.constant 0 : index
      %57 = vector.load %arg7[%c0_35, %c0_36] : memref<32x200xi32, #tpu.memory_space<vmem>>, vector<32x200xi32>
      tpu.vector_store %arg7[%c0_35, %c0_36], %56 {strides = array<i32>} : memref<32x200xi32, #tpu.memory_space<vmem>>, vector<32x200xi32>,
    } else {
    }
    %c0_i32_2 = arith.constant 0 : i32
    %5 = arith.cmpi eq, %arg2, %c0_i32_2 : i32
    %6 = arith.extui %5 : i1 to i32
    %c0_i32_3 = arith.constant 0 : i32
    %7 = arith.cmpi ne, %6, %c0_i32_3 : i32
    scf.if %7 {
      %cst_32 = arith.constant 0xFF800000 : f32
      %54 = vector.broadcast %cst_32 : f32 to vector<1x200xf32>
      %c3_33 = arith.constant 3 : index
      %c0_34 = arith.constant 0 : index
      %55 = vector.load %arg6[%c3_33, %c0_34] : memref<8x200xf32, #tpu.memory_space<vmem>>, vector<1x200xf32>
      tpu.vector_store %arg6[%c3_33, %c0_34], %54 {strides = array<i32>} : memref<8x200xf32, #tpu.memory_space<vmem>>, vector<1x200xf32>,
      %cst_35 = arith.constant 0.000000e+00 : f32
      %56 = vector.broadcast %cst_35 : f32 to vector<3x200xf32>
      %c4_36 = arith.constant 4 : index
      %c0_37 = arith.constant 0 : index
      %57 = vector.load %arg6[%c4_36, %c0_37] : memref<8x200xf32, #tpu.memory_space<vmem>>, vector<3x200xf32>
      tpu.vector_store %arg6[%c4_36, %c0_37], %56 {strides = array<i32>} : memref<8x200xf32, #tpu.memory_space<vmem>>, vector<3x200xf32>,
    } else {
    }
    %c0 = arith.constant 0 : index
    %c0_4 = arith.constant 0 : index
    %c0_5 = arith.constant 0 : index
    %8 = vector.load %arg3[%c0, %c0_4, %c0_5] : memref<1x32x200xf32, #tpu.memory_space<vmem>>, vector<1x32x200xf32>
    %9 = vector.shape_cast %8 : vector<1x32x200xf32> to vector<32x200xf32>
    %c0_6 = arith.constant 0 : index
    %c0_7 = arith.constant 0 : index
    %c0_8 = arith.constant 0 : index
    %10 = vector.load %arg4[%c0_6, %c0_7, %c0_8] : memref<1x1x200xi32, #tpu.memory_space<vmem>>, vector<1x1x200xi32>
    %11 = vector.shape_cast %10 : vector<1x1x200xi32> to vector<1x200xi32>
    %c32_i32 = arith.constant 32 : i32
    %12 = arith.muli %arg2, %c32_i32 : i32
    %13 = vector.broadcast %12 : i32 to vector<1x200xi32>
    %14 = arith.subi %11, %13 : vector<1x200xi32>
    %c3 = arith.constant 3 : index
    %c0_9 = arith.constant 0 : index
    %15 = vector.load %arg6[%c3, %c0_9] : memref<8x200xf32, #tpu.memory_space<vmem>>, vector<1x200xf32>
    %cst = arith.constant dense<0xFF800000> : vector<200xf32>
    %16 = vector.multi_reduction <maximumf>, %9, %cst [0] : vector<32x200xf32> to vector<200xf32>
    %17 = vector.shape_cast %16 : vector<200xf32> to vector<1x200xf32>
    %18 = arith.maximumf %15, %17 : vector<1x200xf32>
    %c3_10 = arith.constant 3 : index
    %c0_11 = arith.constant 0 : index
    %19 = vector.load %arg6[%c3_10, %c0_11] : memref<8x200xf32, #tpu.memory_space<vmem>>, vector<1x200xf32>
    tpu.vector_store %arg6[%c3_10, %c0_11], %18 {strides = array<i32>} : memref<8x200xf32, #tpu.memory_space<vmem>>, vector<1x200xf32>,
    %c4 = arith.constant 4 : index
    %c0_12 = arith.constant 0 : index
    %20 = vector.load %arg6[%c4, %c0_12] : memref<8x200xf32, #tpu.memory_space<vmem>>, vector<1x200xf32>
    %21 = arith.subf %15, %18 : vector<1x200xf32>
    %22 = math.exp %21 : vector<1x200xf32>
    %23 = arith.mulf %20, %22 : vector<1x200xf32>
    %24 = vector.broadcast %18 : vector<1x200xf32> to vector<32x200xf32>
    %25 = arith.subf %9, %24 : vector<32x200xf32>
    %26 = math.exp %25 : vector<32x200xf32>
    %cst_13 = arith.constant dense<0.000000e+00> : vector<200xf32>
    %27 = vector.multi_reduction <add>, %26, %cst_13 [0] : vector<32x200xf32> to vector<200xf32>
    %28 = vector.shape_cast %27 : vector<200xf32> to vector<1x200xf32>
    %29 = arith.addf %23, %28 : vector<1x200xf32>
    %c4_14 = arith.constant 4 : index
    %c0_15 = arith.constant 0 : index
    %30 = vector.load %arg6[%c4_14, %c0_15] : memref<8x200xf32, #tpu.memory_space<vmem>>, vector<1x200xf32>
    tpu.vector_store %arg6[%c4_14, %c0_15], %29 {strides = array<i32>} : memref<8x200xf32, #tpu.memory_space<vmem>>, vector<1x200xf32>,
    %c5 = arith.constant 5 : index
    %c0_16 = arith.constant 0 : index
    %31 = vector.load %arg6[%c5, %c0_16] : memref<8x200xf32, #tpu.memory_space<vmem>>, vector<1x200xf32>
    %cst_17 = arith.constant dense<0.000000e+00> : vector<200xf32>
    %32 = vector.multi_reduction <add>, %9, %cst_17 [0] : vector<32x200xf32> to vector<200xf32>
    %33 = vector.shape_cast %32 : vector<200xf32> to vector<1x200xf32>
    %34 = arith.addf %31, %33 : vector<1x200xf32>
    %c5_18 = arith.constant 5 : index
    %c0_19 = arith.constant 0 : index
    %35 = vector.load %arg6[%c5_18, %c0_19] : memref<8x200xf32, #tpu.memory_space<vmem>>, vector<1x200xf32>
    tpu.vector_store %arg6[%c5_18, %c0_19], %34 {strides = array<i32>} : memref<8x200xf32, #tpu.memory_space<vmem>>, vector<1x200xf32>,
    %c6 = arith.constant 6 : index
    %c0_20 = arith.constant 0 : index
    %36 = vector.load %arg6[%c6, %c0_20] : memref<8x200xf32, #tpu.memory_space<vmem>>, vector<1x200xf32>
    %c0_21 = arith.constant 0 : index
    %c0_22 = arith.constant 0 : index
    %37 = vector.load %arg7[%c0_21, %c0_22] : memref<32x200xi32, #tpu.memory_space<vmem>>, vector<32x200xi32>
    %38 = vector.broadcast %14 : vector<1x200xi32> to vector<32x200xi32>
    %39 = arith.cmpi eq, %37, %38 : vector<32x200xi32>
    %cst_23 = arith.constant 0.000000e+00 : f32
    %40 = vector.broadcast %cst_23 : f32 to vector<32x200xf32>
    %41 = arith.select %39, %9, %40 : vector<32x200xi1>, vector<32x200xf32>
    %cst_24 = arith.constant dense<0.000000e+00> : vector<200xf32>
    %42 = vector.multi_reduction <add>, %41, %cst_24 [0] : vector<32x200xf32> to vector<200xf32>
    %43 = vector.shape_cast %42 : vector<200xf32> to vector<1x200xf32>
    %44 = arith.addf %36, %43 : vector<1x200xf32>
    %c6_25 = arith.constant 6 : index
    %c0_26 = arith.constant 0 : index
    %45 = vector.load %arg6[%c6_25, %c0_26] : memref<8x200xf32, #tpu.memory_space<vmem>>, vector<1x200xf32>
    tpu.vector_store %arg6[%c6_25, %c0_26], %44 {strides = array<i32>} : memref<8x200xf32, #tpu.memory_space<vmem>>, vector<1x200xf32>,
    %c0_i32_27 = arith.constant 0 : i32
    %46 = arith.cmpi eq, %arg2, %c0_i32_27 : i32
    %47 = arith.extui %46 : i1 to i32
    %c0_i32_28 = arith.constant 0 : i32
    %48 = arith.cmpi ne, %47, %c0_i32_28 : i32
    scf.if %48 {
      %c3_32 = arith.constant 3 : index
      %c0_33 = arith.constant 0 : index
      %54 = vector.load %arg6[%c3_32, %c0_33] : memref<8x200xf32, #tpu.memory_space<vmem>>, vector<1x200xf32>
      %c4_34 = arith.constant 4 : index
      %c0_35 = arith.constant 0 : index
      %55 = vector.load %arg6[%c4_34, %c0_35] : memref<8x200xf32, #tpu.memory_space<vmem>>, vector<1x200xf32>
      %56 = math.log %55 : vector<1x200xf32>
      %57 = arith.addf %54, %56 : vector<1x200xf32>
      %c5_36 = arith.constant 5 : index
      %c0_37 = arith.constant 0 : index
      %58 = vector.load %arg6[%c5_36, %c0_37] : memref<8x200xf32, #tpu.memory_space<vmem>>, vector<1x200xf32>
      %cst_38 = arith.constant 3.200000e+01 : f32
      %59 = vector.broadcast %cst_38 : f32 to vector<1x200xf32>
      %60 = arith.mulf %59, %57 : vector<1x200xf32>
      %61 = arith.subf %58, %60 : vector<1x200xf32>
      %c6_39 = arith.constant 6 : index
      %c0_40 = arith.constant 0 : index
      %62 = vector.load %arg6[%c6_39, %c0_40] : memref<8x200xf32, #tpu.memory_space<vmem>>, vector<1x200xf32>
      %63 = arith.subf %57, %62 : vector<1x200xf32>
      %c200_i32 = arith.constant 200 : i32
      %64 = arith.muli %arg1, %c200_i32 : i32
      %65 = tpu.iota {dimensions = array<i32: 1>} : vector<1x200xi32>
      %66 = vector.broadcast %64 : i32 to vector<1x200xi32>
      %67 = arith.addi %66, %65 : vector<1x200xi32>
      %c200_i32_41 = arith.constant 200 : i32
      %68 = vector.broadcast %c200_i32_41 : i32 to vector<1x200xi32>
      %69 = arith.cmpi slt, %67, %68 : vector<1x200xi32>
      %c-100_i32 = arith.constant -100 : i32
      %70 = vector.broadcast %c-100_i32 : i32 to vector<1x200xi32>
      %71 = arith.cmpi ne, %11, %70 : vector<1x200xi32>
      %72 = arith.andi %69, %71 : vector<1x200xi1>
      %c0_42 = arith.constant 0 : index
      %c0_43 = arith.constant 0 : index
      %73 = vector.load %arg6[%c0_42, %c0_43] : memref<8x200xf32, #tpu.memory_space<vmem>>, vector<1x200xf32>
      %cst_44 = arith.constant 0.000000e+00 : f32
      %74 = vector.broadcast %cst_44 : f32 to vector<1x200xf32>
      %75 = arith.select %72, %61, %74 : vector<1x200xi1>, vector<1x200xf32>
      %76 = arith.addf %73, %75 : vector<1x200xf32>
      %c0_45 = arith.constant 0 : index
      %c0_46 = arith.constant 0 : index
      %77 = vector.load %arg6[%c0_45, %c0_46] : memref<8x200xf32, #tpu.memory_space<vmem>>, vector<1x200xf32>
      tpu.vector_store %arg6[%c0_45, %c0_46], %76 {strides = array<i32>} : memref<8x200xf32, #tpu.memory_space<vmem>>, vector<1x200xf32>,
      %c1 = arith.constant 1 : index
      %c0_47 = arith.constant 0 : index
      %78 = vector.load %arg6[%c1, %c0_47] : memref<8x200xf32, #tpu.memory_space<vmem>>, vector<1x200xf32>
      %cst_48 = arith.constant 0.000000e+00 : f32
      %79 = vector.broadcast %cst_48 : f32 to vector<1x200xf32>
      %80 = arith.select %72, %63, %79 : vector<1x200xi1>, vector<1x200xf32>
      %81 = arith.addf %78, %80 : vector<1x200xf32>
      %c1_49 = arith.constant 1 : index
      %c0_50 = arith.constant 0 : index
      %82 = vector.load %arg6[%c1_49, %c0_50] : memref<8x200xf32, #tpu.memory_space<vmem>>, vector<1x200xf32>
      tpu.vector_store %arg6[%c1_49, %c0_50], %81 {strides = array<i32>} : memref<8x200xf32, #tpu.memory_space<vmem>>, vector<1x200xf32>,
      %c2 = arith.constant 2 : index
      %c0_51 = arith.constant 0 : index
      %83 = vector.load %arg6[%c2, %c0_51] : memref<8x200xf32, #tpu.memory_space<vmem>>, vector<1x200xf32>
      %cst_52 = arith.constant 1.000000e+00 : f32
      %cst_53 = arith.constant 0.000000e+00 : f32
      %84 = vector.broadcast %cst_52 : f32 to vector<1x200xf32>
      %85 = vector.broadcast %cst_53 : f32 to vector<1x200xf32>
      %86 = arith.select %72, %84, %85 : vector<1x200xi1>, vector<1x200xf32>
      %87 = arith.addf %83, %86 : vector<1x200xf32>
      %c2_54 = arith.constant 2 : index
      %c0_55 = arith.constant 0 : index
      %88 = vector.load %arg6[%c2_54, %c0_55] : memref<8x200xf32, #tpu.memory_space<vmem>>, vector<1x200xf32>
      tpu.vector_store %arg6[%c2_54, %c0_55], %87 {strides = array<i32>} : memref<8x200xf32, #tpu.memory_space<vmem>>, vector<1x200xf32>,
    } else {
    }
    %c0_i32_29 = arith.constant 0 : i32
    %49 = arith.cmpi eq, %arg1, %c0_i32_29 : i32
    %c0_i32_30 = arith.constant 0 : i32
    %50 = arith.cmpi eq, %arg2, %c0_i32_30 : i32
    %51 = arith.andi %49, %50 : i1
    %52 = arith.extui %51 : i1 to i32
    %c0_i32_31 = arith.constant 0 : i32
    %53 = arith.cmpi ne, %52, %c0_i32_31 : i32
    scf.if %53 {
      %c0_32 = arith.constant 0 : index
      %c0_33 = arith.constant 0 : index
      %54 = vector.load %arg6[%c0_32, %c0_33] : memref<8x200xf32, #tpu.memory_space<vmem>>, vector<1x200xf32>
      %55 = vector.shape_cast %54 : vector<1x200xf32> to vector<1x1x200xf32>
      %cst_34 = arith.constant dense<0.000000e+00> : vector<1xf32>
      %56 = vector.multi_reduction <add>, %55, %cst_34 [1, 2] : vector<1x1x200xf32> to vector<1xf32>
      %57 = vector.shape_cast %56 : vector<1xf32> to vector<1x1x1xf32>
      %58 = vector.extract %57[0, 0, 0] : f32 from vector<1x1x1xf32>
      %c0_35 = arith.constant 0 : index
      %c0_36 = arith.constant 0 : index
      %c0_37 = arith.constant 0 : index
      %59 = memref.load %arg5[%c0_35, %c0_36, %c0_37] : memref<1x1x3xf32, #tpu.memory_space<smem>>
      memref.store %58, %arg5[%c0_35, %c0_36, %c0_37] : memref<1x1x3xf32, #tpu.memory_space<smem>>
      %c1 = arith.constant 1 : index
      %c0_38 = arith.constant 0 : index
      %60 = vector.load %arg6[%c1, %c0_38] : memref<8x200xf32, #tpu.memory_space<vmem>>, vector<1x200xf32>
      %61 = vector.shape_cast %60 : vector<1x200xf32> to vector<1x1x200xf32>
      %cst_39 = arith.constant dense<0.000000e+00> : vector<1xf32>
      %62 = vector.multi_reduction <add>, %61, %cst_39 [1, 2] : vector<1x1x200xf32> to vector<1xf32>
      %63 = vector.shape_cast %62 : vector<1xf32> to vector<1x1x1xf32>
      %64 = vector.extract %63[0, 0, 0] : f32 from vector<1x1x1xf32>
      %c0_40 = arith.constant 0 : index
      %c0_41 = arith.constant 0 : index
      %c1_42 = arith.constant 1 : index
      %65 = memref.load %arg5[%c0_40, %c0_41, %c1_42] : memref<1x1x3xf32, #tpu.memory_space<smem>>
      memref.store %64, %arg5[%c0_40, %c0_41, %c1_42] : memref<1x1x3xf32, #tpu.memory_space<smem>>
      %c2 = arith.constant 2 : index
      %c0_43 = arith.constant 0 : index
      %66 = vector.load %arg6[%c2, %c0_43] : memref<8x200xf32, #tpu.memory_space<vmem>>, vector<1x200xf32>
      %67 = vector.shape_cast %66 : vector<1x200xf32> to vector<1x1x200xf32>
      %cst_44 = arith.constant dense<0.000000e+00> : vector<1xf32>
      %68 = vector.multi_reduction <add>, %67, %cst_44 [1, 2] : vector<1x1x200xf32> to vector<1xf32>
      %69 = vector.shape_cast %68 : vector<1xf32> to vector<1x1x1xf32>
      %70 = vector.extract %69[0, 0, 0] : f32 from vector<1x1x1xf32>
      %c0_45 = arith.constant 0 : index
      %c0_46 = arith.constant 0 : index
      %c2_47 = arith.constant 2 : index
      %71 = memref.load %arg5[%c0_45, %c0_46, %c2_47] : memref<1x1x3xf32, #tpu.memory_space<smem>>
      memref.store %70, %arg5[%c0_45, %c0_46, %c2_47] : memref<1x1x3xf32, #tpu.memory_space<smem>>
    } else {
    }
    return
  }
  func.func @transform_0(%arg0: i32, %arg1: i32, %arg2: i32) -> (i32, i32, i32) {
    %c0_i32 = arith.constant 0 : i32
    return %arg0, %arg2, %arg1 : i32, i32, i32
  }
  func.func @transform_1(%arg0: i32, %arg1: i32, %arg2: i32) -> (i32, i32, i32) {
    %c0_i32 = arith.constant 0 : i32
    %c0_i32_0 = arith.constant 0 : i32
    return %arg0, %c0_i32, %arg1 : i32, i32, i32
  }
  func.func @transform_2(%arg0: i32, %arg1: i32, %arg2: i32) -> (i32, i32, i32) {
    %c0_i32 = arith.constant 0 : i32
    %c0_i32_0 = arith.constant 0 : i32
    %c0_i32_1 = arith.constant 0 : i32
    return %arg0, %c0_i32, %c0_i32_0 : i32, i32, i32
  }
}

</mosaic_0001>

<llo_original>
// kernel: tpu_custom_call.1
$region0: #{tpu_custom_call.1}
  #allocation0 [shape = 'u32[]', space=smem, size = 0x4, offset = 0x4, fixed_abs, tag = 'smem constant byte address 0x4 - core index']
  #allocation1 [shape = 'u32[144,128]{1,0:T(1,128)}', space=vmem, size = 0x12000, scoped, tag = 'internal scratch']
  #allocation2 [shape = 'f32[8,200]{1,0:T(8,128)}', space=vmem, size = 0x2000, scoped, tag = 'scratch operand']
  #allocation3 [shape = 's32[32,200]{1,0:T(8,128)}', space=vmem, size = 0x8000, scoped, tag = 'scratch operand']
  %s0 = inlined_call_operand.hbm [shape: f32[2,32,200], index: 0, kind: input, shape index: {}]
  %s1 = inlined_call_operand.hbm [shape: s32[2,1,200], index: 1, kind: input, shape index: {}]
  %s2 = inlined_call_operand.hbm [shape: f32[2,1,3], index: 2, kind: output, shape index: {}]
  %s3 = sld [smem:[#allocation0]]
  $region65: #{tpu_custom_call.1} parent=0
    _
  %s5 = ssub.s32 1, %s3
  %s6 = scalar_select 0, %s5, %s3
  $region1: #{tpu_custom_call.1} parent=0
    #allocation4 [shape = 'u8[65536]{0}', space=vmem, size = 0x10000, scoped, tag = 'input window, operand 0']
    #allocation5 [shape = 's32[2]{0}', space=sflag, size = 0x8, scoped, tag = 'scoped memory for tpu_custom_call.1']
    #allocation6 [shape = 's32[2]{0}', space=sflag, size = 0x8, scoped, tag = 'scoped memory for tpu_custom_call.1']
    #allocation7 [shape = 'u8[2048]{0}', space=vmem, size = 0x800, scoped, tag = 'input window, operand 1']
    #allocation8 [shape = 's32[2]{0}', space=sflag, size = 0x8, scoped, tag = 'scoped memory for tpu_custom_call.1']
    #allocation9 [shape = 'u8[1024]{0}', space=smem, size = 0x400, scoped, tag = 'output window, operand 0']
    %7 = vsyncpa [#allocation5], 0
    %s8 = scalar_lea.sflag [#allocation5], 1
    %9 = vsyncpa %s8, 0
    %10 = vsyncpa [#allocation8], 0
    %s11 = scalar_lea.sflag [#allocation8], 1
    %12 = vsyncpa %s11, 0
    %13 = vsyncpa [#allocation6], 0
    %s14 = scalar_lea.sflag [#allocation6], 1
    %15 = vsyncpa %s14, 0
    loop: start=0, step=1, limit=4
    $region2: #{tpu_custom_call.1} parent=1 // loop_pre_header
      _
    $region3: #{tpu_custom_call.1} parent=1 // loop_header
      %s17 = sphi 0, %s21
      %p18 = scmp.ge.s32.totalorder %s17, 4
      %s24 = sphi 0, %s43
      %s25 = sphi 0, %s39
      %s26 = sphi 0, %s35
      %s27 = sphi 0, %s24
      %s28 = sphi 0, %s25
      %s29 = sphi 0, %s26
      %s30 = sphi 0, %s27
      %s31 = sphi 0, %s28
      %s32 = sphi 0, %s29
      %s50 = sphi 0, %s52
      %s53 = sphi 0, %s50
      %s54 = sphi 0, %s53
      %s70 = sphi 0, %s54
      %s78 = sphi 0, %s80
      %s81 = sphi 0, %s78
      %s82 = sphi 0, %s81
      %s98 = sphi 0, %s82
      %s104 = sphi 0, %s106
      %s107 = sphi 0, %s104
      %s108 = sphi 0, %s107
      %s124 = sphi 0, %s108
    $region4: #{tpu_custom_call.1} parent=1 // loop_header_branch
      %20 = sbr.rel (%p18) target = $region8
    $region5: #{tpu_custom_call.1} parent=1 // loop_body
      %s22 = ssub.s32 %s17, 1
      %s23 = ssub.s32 %s17, 2
      %s33 = sadd.s32 1, %s26
      %p34 = scmp.ge.s32.totalorder %s33, 1
      %s35 = scalar_select %p34, 0, %s33
      %s36 = sadd.s32 1, %s25
      %s37 = scalar_select %p34, %s36, %s25
      %p38 = scmp.ge.s32.totalorder %s37, 1
      %s39 = scalar_select %p38, 0, %s37
      %s40 = sadd.s32 1, %s24
      %s41 = scalar_select %p38, %s40, %s24
      %p42 = scmp.ge.s32.totalorder %s41, 2
      %s43 = scalar_select %p42, 0, %s41
      %s44 = ssub.s32 %s24, %s43
      %s45 = ssub.s32 %s26, %s35
      %s46 = sor.u32 %s44, %s45
      %s47 = ssub.s32 %s25, %s39
      %s48 = sor.u32 %s46, %s47
      %p49 = scmp.eq.s32.totalorder %s48, 0
      %s51 = sadd.s32 %s50, 1
      %s52 = scalar_select %p49, %s50, %s51
      %p55 = pneg %p49
      %p56 = scmp.eq.s32.totalorder %s17, 1
      %p57 = por %p55, %p56
      %p58 = scmp.ne.s32.totalorder %s50, %s53
      %p59 = scmp.eq.s32.totalorder %s17, 0
      %p60 = por %p58, %p59
      %p61 = scmp.ne.s32.totalorder %s50, %s53
      %p62 = scmp.eq.s32.totalorder %s22, 1
      %p63 = por %p61, %p62
      %p64 = scmp.ne.s32.totalorder %s53, %s54
      %p65 = scmp.eq.s32.totalorder %s22, 0
      %p66 = por %p64, %p65
      %p67 = scmp.ne.s32.totalorder %s53, %s54
      %p68 = scmp.eq.s32.totalorder %s23, 1
      %p69 = por %p67, %p68
      %p71 = scmp.ne.s32.totalorder %s54, %s70
      %p72 = scmp.eq.s32.totalorder %s23, 0
      %p73 = por %p71, %p72
      %s74 = ssub.s32 %s24, %s43
      %s75 = ssub.s32 %s25, %s39
      %s76 = sor.u32 %s74, %s75
      %p77 = scmp.eq.s32.totalorder %s76, 0
      %s79 = sadd.s32 %s78, 1
      %s80 = scalar_select %p77, %s78, %s79
      %p83 = pneg %p77
      %p84 = scmp.eq.s32.totalorder %s17, 1
      %p85 = por %p83, %p84
      %p86 = scmp.ne.s32.totalorder %s78, %s81
      %p87 = scmp.eq.s32.totalorder %s17, 0
      %p88 = por %p86, %p87
      %p89 = scmp.ne.s32.totalorder %s78, %s81
      %p90 = scmp.eq.s32.totalorder %s22, 1
      %p91 = por %p89, %p90
      %p92 = scmp.ne.s32.totalorder %s81, %s82
      %p93 = scmp.eq.s32.totalorder %s22, 0
      %p94 = por %p92, %p93
      %p95 = scmp.ne.s32.totalorder %s81, %s82
      %p96 = scmp.eq.s32.totalorder %s23, 1
      %p97 = por %p95, %p96
      %p99 = scmp.ne.s32.totalorder %s82, %s98
      %p100 = scmp.eq.s32.totalorder %s23, 0
      %p101 = por %p99, %p100
      %s102 = ssub.s32 %s24, %s43
      %p103 = scmp.eq.s32.totalorder %s102, 0
      %s105 = sadd.s32 %s104, 1
      %s106 = scalar_select %p103, %s104, %s105
      %p109 = pneg %p103
      %p110 = scmp.eq.s32.totalorder %s17, 1
      %p111 = por %p109, %p110
      %p112 = scmp.ne.s32.totalorder %s104, %s107
      %p113 = scmp.eq.s32.totalorder %s17, 0
      %p114 = por %p112, %p113
      %p115 = scmp.ne.s32.totalorder %s104, %s107
      %p116 = scmp.eq.s32.totalorder %s22, 1
      %p117 = por %p115, %p116
      %p118 = scmp.ne.s32.totalorder %s107, %s108
      %p119 = scmp.eq.s32.totalorder %s22, 0
      %p120 = por %p118, %p119
      %p121 = scmp.ne.s32.totalorder %s107, %s108
      %p122 = scmp.eq.s32.totalorder %s23, 1
      %p123 = por %p121, %p122
      %p125 = scmp.ne.s32.totalorder %s108, %s124
      %p126 = scmp.eq.s32.totalorder %s23, 0
      %p127 = por %p125, %p126
      %p128 = scmp.le.s32.totalorder 1, %s17
      %p129 = scmp.lt.s32.totalorder %s17, 3
      %p130 = pnand %p128, %p129
      %p131 = pneg %p130
      // Predicated region
      $region9: #{tpu_custom_call.1} parent=5 // pred_check
        _
      $region10: #{tpu_custom_call.1} parent=5 // pred_check_branch
        %133 = sbr.rel (%p130) target = $region12
      $region11: #{tpu_custom_call.1} parent=5 // pred_region
        %s134 = ssub.s32 %s17, 1
      $region12: #{tpu_custom_call.1} parent=5 // pred_fallthru
        _
      %p135 = scmp.lt.s32.totalorder %s17, 2
      // Predicated region
      $region13: #{tpu_custom_call.1} parent=5 // pred_check
        %p136 = pneg %p135
      $region14: #{tpu_custom_call.1} parent=5 // pred_check_branch
        %138 = sbr.rel (%p136) target = $region16
      $region15: #{tpu_custom_call.1} parent=5 // pred_region
        // Predicated region
        $region17: #{tpu_custom_call.1} parent=15 // pred_check
          %p139 = pneg %p60
        $region18: #{tpu_custom_call.1} parent=15 // pred_check_branch
          %141 = sbr.rel (%p139) target = $region20
        $region19: #{tpu_custom_call.1} parent=15 // pred_region
          %s142 = sand.u32 %s50, 1
          %s143 = scalar_lea.sflag [#allocation5], %s142
          %s144 = sand.u32 %s50, 1
          %s145 = smul.addr %s144, 64
          %s146 = scalar_lea.vmem [#allocation4], %s145
          %s147 = smul.u32 4, %s26
          %s148 = smul.u32 2, %s25
          %s150 = ssub.s32 1024, 1024
          %151 = vsyncadd %s143, %s150
          %s152 = smul.addr %s147, 2
          %s153 = sadd.s32 %s148, %s152
          %s154 = smul.addr %s24, 8
          %s155 = sadd.s32 %s153, %s154
          %s156 = smul.addr %s155, 128
          %s157 = scalar_lea.hbm %s0, %s156
          %s158 = sshll.u32 %s146, 4
          %s159 = int_to_ptr.vmem [resolvable:$true] %s158
          %164 = dma.hbm_to_vmem [thread:$0]  %s157, 1024, %s159, %s143, 256, 256, 16
        $region20: #{tpu_custom_call.1} parent=15 // pred_fallthru
          _
        // Predicated region
        $region21: #{tpu_custom_call.1} parent=15 // pred_check
          %p165 = pneg %p88
        $region22: #{tpu_custom_call.1} parent=15 // pred_check_branch
          %167 = sbr.rel (%p165) target = $region24
        $region23: #{tpu_custom_call.1} parent=15 // pred_region
          %s168 = sand.u32 %s78, 1
          %s169 = scalar_lea.sflag [#allocation8], %s168
          %s170 = sand.u32 %s78, 1
          %s171 = smul.addr %s170, 2
          %s172 = scalar_lea.vmem [#allocation7], %s171
          %s173 = smul.u32 2, %s25
          %s175 = ssub.s32 32, 32
          %176 = vsyncadd %s169, %s175
          %s177 = smul.addr %s24, 2
          %s178 = sadd.s32 %s173, %s177
          %s179 = smul.addr %s178, 16
          %s180 = scalar_lea.hbm %s1, %s179
          %s182 = sshll.u32 %s172, 4
          %s183 = int_to_ptr.vmem [resolvable:$true] %s182
          %185 = dma.hbm_to_vmem [thread:$0]  %s180, 32, %s183, %s169
        $region24: #{tpu_custom_call.1} parent=15 // pred_fallthru
          _
      $region16: #{tpu_custom_call.1} parent=5 // pred_fallthru
        _
      %p186 = scmp.le.s32.totalorder 1, %s17
      %p187 = scmp.lt.s32.totalorder %s17, 3
      %p188 = pnand %p186, %p187
      %p189 = pneg %p188
      // Predicated region
      $region25: #{tpu_custom_call.1} parent=5 // pred_check
        _
      $region26: #{tpu_custom_call.1} parent=5 // pred_check_branch
        %191 = sbr.rel (%p188) target = $region28
      $region27: #{tpu_custom_call.1} parent=5 // pred_region
        %s192 = ssub.s32 %s17, 1
        %s193 = sand.u32 %s53, 1
        %s194 = scalar_lea.sflag [#allocation5], %s193
        %s195 = sand.u32 %s53, 1
        %s196 = smul.addr %s195, 64
        %s197 = scalar_lea.vmem [#allocation4], %s196
        // Predicated region
        $region29: #{tpu_custom_call.1} parent=27 // pred_check
          %p198 = pneg %p66
        $region30: #{tpu_custom_call.1} parent=27 // pred_check_branch
          %200 = sbr.rel (%p198) target = $region32
        $region31: #{tpu_custom_call.1} parent=27 // pred_region
          %201 = dma.done %s194, 1024
        $region32: #{tpu_custom_call.1} parent=27 // pred_fallthru
          _
        %s202 = sand.u32 %s81, 1
        %s203 = scalar_lea.sflag [#allocation8], %s202
        %s204 = sand.u32 %s81, 1
        %s205 = smul.addr %s204, 2
        %s206 = scalar_lea.vmem [#allocation7], %s205
        // Predicated region
        $region33: #{tpu_custom_call.1} parent=27 // pred_check
          %p207 = pneg %p94
        $region34: #{tpu_custom_call.1} parent=27 // pred_check_branch
          %209 = sbr.rel (%p207) target = $region36
        $region35: #{tpu_custom_call.1} parent=27 // pred_region
          %210 = dma.done %s203, 32
        $region36: #{tpu_custom_call.1} parent=27 // pred_fallthru
          _
        %s211 = sand.u32 %s53, 1
        %s212 = scalar_lea.sflag [#allocation5], %s211
        %s213 = sand.u32 %s53, 1
        %s214 = smul.addr %s213, 64
        %s215 = scalar_lea.vmem [#allocation4], %s214
        %p216 = pneg %p66
        %p217 = pneg %p63
        %s218 = sand.u32 %s81, 1
        %s219 = scalar_lea.sflag [#allocation8], %s218
        %s220 = sand.u32 %s81, 1
        %s221 = smul.addr %s220, 2
        %s222 = scalar_lea.vmem [#allocation7], %s221
        %p223 = pneg %p94
        %p224 = pneg %p91
        %p225 = pneg %p120
        %p226 = pneg %p117
        %s227 = sand.u32 %s107, 1
        %s228 = scalar_lea.sflag [#allocation6], %s227
        %s229 = sand.u32 %s107, 1
        %s230 = smul.addr %s229, 128
        %s231 = scalar_lea.smem [#allocation9], %s230
        %s232 = smul.u32 4, %s29
        %s233 = smul.u32 2, %s28
        %s234 = smul.u32 2, %s28
        %p235 = scmp.eq.s32.totalorder %s28, 0
        %p236 = scmp.eq.s32.totalorder %s29, 0
        %p237 = pnand %p235, %p236
        %p238 = pneg %p237
        // Predicated region
        $region37: #{tpu_custom_call.1} parent=27 // pred_check
          _
        $region38: #{tpu_custom_call.1} parent=27 // pred_check_branch
          %240 = sbr.rel (%p237) target = $region40
        $region39: #{tpu_custom_call.1} parent=27 // pred_region
          %241 = vst [vmem:[#allocation2] sm:$0x7] 0.0
          %vm242 = vcmask 583680
          %243 = vst.msk [vmem:[#allocation2 + $0x8] sm:$0x7] %vm242, 0.0
          %v244 = vlaneseq
          %v245 = vshrl.u32 %v244, 7
          %v246 = vadd.s32 %v245, 8
          %v247 = vadd.s32 %v245, 16
          %v248 = vadd.s32 %v245, 24
          %249 = vst [vmem:[#allocation3] sm:$0xff] %v245
          %vm250 = vcmask 588800
          %251 = vst.msk [vmem:[#allocation3 + $0x8] sm:$0xff] %vm250, %v245
          %252 = vst [vmem:[#allocation3 + $0x10] sm:$0xff] %v246
          %253 = vst.msk [vmem:[#allocation3 + $0x18] sm:$0xff] %vm250, %v246
          %254 = vst [vmem:[#allocation3 + $0x20] sm:$0xff] %v247
          %255 = vst.msk [vmem:[#allocation3 + $0x28] sm:$0xff] %vm250, %v247
          %256 = vst [vmem:[#allocation3 + $0x30] sm:$0xff] %v248
          %257 = vst.msk [vmem:[#allocation3 + $0x38] sm:$0xff] %vm250, %v248
        $region40: #{tpu_custom_call.1} parent=27 // pred_fallthru
          _
        // Predicated region
        $region41: #{tpu_custom_call.1} parent=27 // pred_check
          %p258 = pneg %p236
        $region42: #{tpu_custom_call.1} parent=27 // pred_check_branch
          %260 = sbr.rel (%p258) target = $region44
        $region43: #{tpu_custom_call.1} parent=27 // pred_region
          %v261 = vlaneseq
          %vm262 = vcmp.ge.s32.totalorder %v261, 0
          %vm263 = vcmp.lt.s32.totalorder %v261, 200
          %vm264 = vmand %vm262, %vm263
          %s265 = scalar_lea.vmem [#allocation2], 3
          %266 = vst.msk [vmem:[%s265] ss:$8 sm:$0x3] %vm264, -inf
          %267 = vst.msk [vmem:[%s265] ss:$8 sm:$0x0] %vm264, -inf
          %268 = vst [vmem:[#allocation2] sm:$0x70] 0.0
          %vm269 = vcmask 587780
          %270 = vst.msk [vmem:[#allocation2 + $0x8] sm:$0x70] %vm269, 0.0
        $region44: #{tpu_custom_call.1} parent=27 // pred_fallthru
          _
        %v271 = vld [vmem:[%s197] sm:$0xff]
        %v272 = vld [vmem:[%s197 + $0x8] sm:$0xff]
        %v273 = vld [vmem:[%s197 + $0x10] sm:$0xff]
        %v274 = vld [vmem:[%s197 + $0x18] sm:$0xff]
        %v275 = vld [vmem:[%s197 + $0x20] sm:$0xff]
        %v276 = vld [vmem:[%s197 + $0x28] sm:$0xff]
        %v277 = vld [vmem:[%s197 + $0x30] sm:$0xff]
        %v278 = vld [vmem:[%s197 + $0x38] sm:$0xff]
        %v279 = vld [vmem:[%s206] sm:$0x3]
        %s280 = smul.u32 %s29, 32
        %v281 = vstv %s280
        %v282 = vsub.s32 %v279, %v281
        %s283 = scalar_lea.vmem [#allocation2], 3
        %v284 = vld [vmem:[%s283] ss:$8 sm:$0x3]
        %v285 = vmax.f32 %v271, %v275
        %v286 = vmax.f32 %v273, %v277
        %v287 = vmax.f32 %v285, %v286
        %v288 = vrot.slane %v287, 4
        %v289 = vmax.f32 %v287, %v288
        %v290 = vrot.slane %v289, 2
        %v291 = vmax.f32 %v289, %v290
        %v292 = vrot.slane %v291, 1
        %v293 = vmax.f32 %v291, %v292
        %vm294 = vcmask 588800
        %v295 = vsel %vm294, %v272, -inf
        %v296 = vsel %vm294, %v274, -inf
        %v297 = vsel %vm294, %v276, -inf
        %v298 = vmax.f32 %v295, %v297
        %v299 = vsel %vm294, %v278, -inf
        %v300 = vmax.f32 %v296, %v299
        %v301 = vmax.f32 %v298, %v300
        %v302 = vrot.slane %v301, 4
        %v303 = vmax.f32 %v301, %v302
        %v304 = vrot.slane %v303, 2
        %v305 = vmax.f32 %v303, %v304
        %v306 = vrot.slane %v305, 1
        %v307 = vmax.f32 %v305, %v306
        %v310 = vcombine.low %v293, %v307
        %v312 = vunpack.c.l.s4 1966171168
        %v313 = vunpack.c.0.s8 %v312
        %v314 = vlaneseq
        %v315 = vshrl.u32 %v314, 7
        %v316 = vsub.s32 %v313, %v315
        %v317 = vrot.slane %v310, %v316
        %v319 = vunpack.c.l.s4 1966171168
        %v320 = vunpack.c.0.s8 %v319
        %v321 = vlaneseq
        %v322 = vshrl.u32 %v321, 7
        %v323 = vsub.s32 %v320, %v322
        %v324 = vrot.slane %v317, %v323
        %v326 = vmax.f32 %v284, %v324
        %v327 = vlaneseq
        %vm328 = vcmp.ge.s32.totalorder %v327, 0
        %vm329 = vcmp.lt.s32.totalorder %v327, 200
        %vm330 = vmand %vm328, %vm329
        %331 = vst.msk [vmem:[%s283] ss:$8 sm:$0x3] %vm330, %v326
        %332 = vst.msk [vmem:[%s283] ss:$8 sm:$0x0] %vm330, %v326
        %s333 = scalar_lea.vmem [#allocation2], 4
        %v334 = vld [vmem:[%s333] ss:$8 sm:$0x3]
        %v335 = vsub.f32 %v284, %v326
        %v336 = vmul.f32 %v335, 1.442695
        %v337 = vpow.pop %v336
        %v338 = vmul.f32 %v334, %v337
        %v340 = vlaneseq
        %v341 = vshrl.u32 %v340, 7
        %v342 = vsub.s32 0, %v341
        %v343 = vrot.slane %v326, %v342
        %v344 = vlaneseq
        %v345 = vshrl.u32 %v344, 7
        %v346 = vsub.s32 1, %v345
        %v347 = vrot.slane %v326, %v346
        %v350 = vsub.f32 %v271, %v343
        %v351 = vsub.f32 %v272, %v347
        %v352 = vsub.f32 %v273, %v343
        %v353 = vsub.f32 %v274, %v347
        %v354 = vsub.f32 %v275, %v343
        %v355 = vsub.f32 %v276, %v347
        %v356 = vsub.f32 %v277, %v343
        %v357 = vsub.f32 %v278, %v347
        %v358 = vmul.f32 %v350, 1.442695
        %v359 = vpow.pop %v358
        %v360 = vmul.f32 %v351, 1.442695
        %v361 = vpow.pop %v360
        %v362 = vmul.f32 %v352, 1.442695
        %v363 = vpow.pop %v362
        %v364 = vmul.f32 %v353, 1.442695
        %v365 = vpow.pop %v364
        %v366 = vmul.f32 %v354, 1.442695
        %v367 = vpow.pop %v366
        %v368 = vmul.f32 %v355, 1.442695
        %v369 = vpow.pop %v368
        %v370 = vmul.f32 %v356, 1.442695
        %v371 = vpow.pop %v370
        %v372 = vmul.f32 %v357, 1.442695
        %v373 = vpow.pop %v372
        %v374 = vadd.f32 %v359, %v363
        %v375 = vadd.f32 %v374, %v367
        %v376 = vadd.f32 %v375, %v371
        %v377 = vrot.slane %v376, 4
        %v378 = vadd.f32 %v376, %v377
        %v379 = vrot.slane %v378, 2
        %v380 = vadd.f32 %v378, %v379
        %v381 = vrot.slane %v380, 1
        %v382 = vadd.f32 %v380, %v381
        %v383 = vsel %vm294, %v361, 0.0
        %v384 = vsel %vm294, %v365, 0.0
        %v385 = vadd.f32 %v383, %v384
        %v386 = vsel %vm294, %v369, 0.0
        %v387 = vadd.f32 %v385, %v386
        %v388 = vsel %vm294, %v373, 0.0
        %v389 = vadd.f32 %v387, %v388
        %v390 = vrot.slane %v389, 4
        %v391 = vadd.f32 %v389, %v390
        %v392 = vrot.slane %v391, 2
        %v393 = vadd.f32 %v391, %v392
        %v394 = vrot.slane %v393, 1
        %v395 = vadd.f32 %v393, %v394
        %v398 = vcombine.low %v382, %v395
        %v400 = vunpack.c.l.s4 1966171168
        %v401 = vunpack.c.0.s8 %v400
        %v402 = vlaneseq
        %v403 = vshrl.u32 %v402, 7
        %v404 = vsub.s32 %v401, %v403
        %v405 = vrot.slane %v398, %v404
        %v407 = vunpack.c.l.s4 1966171168
        %v408 = vunpack.c.0.s8 %v407
        %v409 = vlaneseq
        %v410 = vshrl.u32 %v409, 7
        %v411 = vsub.s32 %v408, %v410
        %v412 = vrot.slane %v405, %v411
        %v414 = vadd.f32 %v338, %v412
        %415 = vst.msk [vmem:[%s333] ss:$8 sm:$0x3] %vm330, %v414
        %416 = vst.msk [vmem:[%s333] ss:$8 sm:$0x0] %vm330, %v414
        %s417 = scalar_lea.vmem [#allocation2], 5
        %v418 = vld [vmem:[%s417] ss:$8 sm:$0x3]
        %v419 = vadd.f32 %v271, %v273
        %v420 = vadd.f32 %v419, %v275
        %v421 = vadd.f32 %v420, %v277
        %v422 = vrot.slane %v421, 4
        %v423 = vadd.f32 %v421, %v422
        %v424 = vrot.slane %v423, 2
        %v425 = vadd.f32 %v423, %v424
        %v426 = vrot.slane %v425, 1
        %v427 = vadd.f32 %v425, %v426
        %v428 = vsel %vm294, %v272, 0.0
        %v429 = vsel %vm294, %v274, 0.0
        %v430 = vadd.f32 %v428, %v429
        %v431 = vsel %vm294, %v276, 0.0
        %v432 = vadd.f32 %v430, %v431
        %v433 = vsel %vm294, %v278, 0.0
        %v434 = vadd.f32 %v432, %v433
        %v435 = vrot.slane %v434, 4
        %v436 = vadd.f32 %v434, %v435
        %v437 = vrot.slane %v436, 2
        %v438 = vadd.f32 %v436, %v437
        %v439 = vrot.slane %v438, 1
        %v440 = vadd.f32 %v438, %v439
        %v443 = vcombine.low %v427, %v440
        %v445 = vunpack.c.l.s4 1966171168
        %v446 = vunpack.c.0.s8 %v445
        %v447 = vlaneseq
        %v448 = vshrl.u32 %v447, 7
        %v449 = vsub.s32 %v446, %v448
        %v450 = vrot.slane %v443, %v449
        %v452 = vunpack.c.l.s4 1966171168
        %v453 = vunpack.c.0.s8 %v452
        %v454 = vlaneseq
        %v455 = vshrl.u32 %v454, 7
        %v456 = vsub.s32 %v453, %v455
        %v457 = vrot.slane %v450, %v456
        %v459 = vadd.f32 %v418, %v457
        %460 = vst.msk [vmem:[%s417] ss:$8 sm:$0x3] %vm330, %v459
        %461 = vst.msk [vmem:[%s417] ss:$8 sm:$0x0] %vm330, %v459
        %s462 = scalar_lea.vmem [#allocation2], 6
        %v463 = vld [vmem:[%s462] ss:$8 sm:$0x3]
        %v464 = vld [vmem:[#allocation3] sm:$0xff]
        %v465 = vld [vmem:[#allocation3 + $0x8] sm:$0xff]
        %v466 = vld [vmem:[#allocation3 + $0x10] sm:$0xff]
        %v467 = vld [vmem:[#allocation3 + $0x18] sm:$0xff]
        %v468 = vld [vmem:[#allocation3 + $0x20] sm:$0xff]
        %v469 = vld [vmem:[#allocation3 + $0x28] sm:$0xff]
        %v470 = vld [vmem:[#allocation3 + $0x30] sm:$0xff]
        %v471 = vld [vmem:[#allocation3 + $0x38] sm:$0xff]
        %v472 = vlaneseq
        %v473 = vshrl.u32 %v472, 7
        %v474 = vsub.s32 0, %v473
        %v475 = vrot.slane %v282, %v474
        %v476 = vlaneseq
        %v477 = vshrl.u32 %v476, 7
        %v478 = vsub.s32 1, %v477
        %v479 = vrot.slane %v282, %v478
        %vm480 = vcmp.eq.s32.totalorder %v464, %v475
        %vm481 = vcmp.eq.s32.totalorder %v465, %v479
        %vm482 = vcmp.eq.s32.totalorder %v466, %v475
        %vm483 = vcmp.eq.s32.totalorder %v467, %v479
        %vm484 = vcmp.eq.s32.totalorder %v468, %v475
        %vm485 = vcmp.eq.s32.totalorder %v469, %v479
        %vm486 = vcmp.eq.s32.totalorder %v470, %v475
        %vm487 = vcmp.eq.s32.totalorder %v471, %v479
        %v488 = vsel %vm480, %v271, 0.0
        %v489 = vsel %vm481, %v272, 0.0
        %v490 = vsel %vm482, %v273, 0.0
        %v491 = vsel %vm483, %v274, 0.0
        %v492 = vsel %vm484, %v275, 0.0
        %v493 = vsel %vm485, %v276, 0.0
        %v494 = vsel %vm486, %v277, 0.0
        %v495 = vsel %vm487, %v278, 0.0
        %v496 = vadd.f32 %v488, %v490
        %v497 = vadd.f32 %v496, %v492
        %v498 = vadd.f32 %v497, %v494
        %v499 = vrot.slane %v498, 4
        %v500 = vadd.f32 %v498, %v499
        %v501 = vrot.slane %v500, 2
        %v502 = vadd.f32 %v500, %v501
        %v503 = vrot.slane %v502, 1
        %v504 = vadd.f32 %v502, %v503
        %v505 = vsel %vm294, %v489, 0.0
        %v506 = vsel %vm294, %v491, 0.0
        %v507 = vadd.f32 %v505, %v506
        %v508 = vsel %vm294, %v493, 0.0
        %v509 = vadd.f32 %v507, %v508
        %v510 = vsel %vm294, %v495, 0.0
        %v511 = vadd.f32 %v509, %v510
        %v512 = vrot.slane %v511, 4
        %v513 = vadd.f32 %v511, %v512
        %v514 = vrot.slane %v513, 2
        %v515 = vadd.f32 %v513, %v514
        %v516 = vrot.slane %v515, 1
        %v517 = vadd.f32 %v515, %v516
        %v520 = vcombine.low %v504, %v517
        %v522 = vunpack.c.l.s4 1966171168
        %v523 = vunpack.c.0.s8 %v522
        %v524 = vlaneseq
        %v525 = vshrl.u32 %v524, 7
        %v526 = vsub.s32 %v523, %v525
        %v527 = vrot.slane %v520, %v526
        %v529 = vunpack.c.l.s4 1966171168
        %v530 = vunpack.c.0.s8 %v529
        %v531 = vlaneseq
        %v532 = vshrl.u32 %v531, 7
        %v533 = vsub.s32 %v530, %v532
        %v534 = vrot.slane %v527, %v533
        %v536 = vadd.f32 %v463, %v534
        %537 = vst.msk [vmem:[%s462] ss:$8 sm:$0x3] %vm330, %v536
        %538 = vst.msk [vmem:[%s462] ss:$8 sm:$0x0] %vm330, %v536
        // Predicated region
        $region45: #{tpu_custom_call.1} parent=27 // pred_check
          %p539 = pneg %p236
        $region46: #{tpu_custom_call.1} parent=27 // pred_check_branch
          %541 = sbr.rel (%p539) target = $region48
        $region47: #{tpu_custom_call.1} parent=27 // pred_region
          %v542 = vld [vmem:[%s283] ss:$8 sm:$0x3]
          %v543 = vld [vmem:[%s333] ss:$8 sm:$0x3]
          %v544 = vlog2.pop %v543
          %v545 = vmul.f32 %v544, 0.6931472
          %v546 = vadd.f32 %v542, %v545
          %v547 = vld [vmem:[%s417] ss:$8 sm:$0x3]
          %v548 = vmul.f32 %v546, 32.0
          %v549 = vsub.f32 %v547, %v548
          %v550 = vld [vmem:[%s462] ss:$8 sm:$0x3]
          %v551 = vsub.f32 %v546, %v550
          %s552 = smul.u32 %s28, 200
          %v553 = vlaneseq
          %v554 = vand.u32 %v553, 127
          %v555 = vadd.s32 %v554, 128
          %v556 = vstv %s552
          %v557 = vadd.s32 %v556, %v554
          %v558 = vadd.s32 %v556, %v555
          %vm559 = vcmp.lt.s32.totalorder %v557, 200
          %vm560 = vcmp.lt.s32.totalorder %v558, 200
          %vm561 = vcmp.ne.s32.totalorder %v279, 4294967196
          %v562 = vsel %vm561, 1, 0
          %v563 = vlaneseq
          %v564 = vshrl.u32 %v563, 7
          %v565 = vsub.s32 0, %v564
          %v566 = vrot.slane %v562, %v565
          %v567 = vlaneseq
          %v568 = vshrl.u32 %v567, 7
          %v569 = vsub.s32 1, %v568
          %v570 = vrot.slane %v562, %v569
          %vm571 = vcmp.ne.s32.totalorder %v566, 0
          %vm572 = vcmp.ne.s32.totalorder %v570, 0
          %vm573 = vmand %vm559, %vm571
          %vm574 = vmand %vm560, %vm572
          %v575 = vld [vmem:[#allocation2] ss:$8 sm:$0x3]
          %v577 = vlaneseq
          %v578 = vshrl.u32 %v577, 7
          %v579 = vsub.s32 0, %v578
          %v580 = vrot.slane %v549, %v579
          %v581 = vlaneseq
          %v582 = vshrl.u32 %v581, 7
          %v583 = vsub.s32 1, %v582
          %v584 = vrot.slane %v549, %v583
          %v587 = vsel %vm573, %v580, 0.0
          %v588 = vsel %vm574, %v584, 0.0
          %v591 = vcombine.low %v587, %v588
          %v593 = vunpack.c.l.s4 1966171168
          %v594 = vunpack.c.0.s8 %v593
          %v595 = vlaneseq
          %v596 = vshrl.u32 %v595, 7
          %v597 = vsub.s32 %v594, %v596
          %v598 = vrot.slane %v591, %v597
          %v600 = vunpack.c.l.s4 1966171168
          %v601 = vunpack.c.0.s8 %v600
          %v602 = vlaneseq
          %v603 = vshrl.u32 %v602, 7
          %v604 = vsub.s32 %v601, %v603
          %v605 = vrot.slane %v598, %v604
          %v607 = vadd.f32 %v575, %v605
          %608 = vst.msk [vmem:[#allocation2] ss:$8 sm:$0x3] %vm330, %v607
          %609 = vst.msk [vmem:[#allocation2] ss:$8 sm:$0x0] %vm330, %v607
          %s610 = scalar_lea.vmem [#allocation2], 1
          %v611 = vld [vmem:[%s610] ss:$8 sm:$0x3]
          %v613 = vlaneseq
          %v614 = vshrl.u32 %v613, 7
          %v615 = vsub.s32 0, %v614
          %v616 = vrot.slane %v551, %v615
          %v617 = vlaneseq
          %v618 = vshrl.u32 %v617, 7
          %v619 = vsub.s32 1, %v618
          %v620 = vrot.slane %v551, %v619
          %v623 = vsel %vm573, %v616, 0.0
          %v624 = vsel %vm574, %v620, 0.0
          %v627 = vcombine.low %v623, %v624
          %v629 = vunpack.c.l.s4 1966171168
          %v630 = vunpack.c.0.s8 %v629
          %v631 = vlaneseq
          %v632 = vshrl.u32 %v631, 7
          %v633 = vsub.s32 %v630, %v632
          %v634 = vrot.slane %v627, %v633
          %v636 = vunpack.c.l.s4 1966171168
          %v637 = vunpack.c.0.s8 %v636
          %v638 = vlaneseq
          %v639 = vshrl.u32 %v638, 7
          %v640 = vsub.s32 %v637, %v639
          %v641 = vrot.slane %v634, %v640
          %v643 = vadd.f32 %v611, %v641
          %644 = vst.msk [vmem:[%s610] ss:$8 sm:$0x3] %vm330, %v643
          %645 = vst.msk [vmem:[%s610] ss:$8 sm:$0x0] %vm330, %v643
          %s646 = scalar_lea.vmem [#allocation2], 2
          %v647 = vld [vmem:[%s646] ss:$8 sm:$0x3]
          %v648 = vsel %vm573, 1.0, 0.0
          %v649 = vsel %vm574, 1.0, 0.0
          %v652 = vcombine.low %v648, %v649
          %v654 = vunpack.c.l.s4 1966171168
          %v655 = vunpack.c.0.s8 %v654
          %v656 = vlaneseq
          %v657 = vshrl.u32 %v656, 7
          %v658 = vsub.s32 %v655, %v657
          %v659 = vrot.slane %v652, %v658
          %v661 = vunpack.c.l.s4 1966171168
          %v662 = vunpack.c.0.s8 %v661
          %v663 = vlaneseq
          %v664 = vshrl.u32 %v663, 7
          %v665 = vsub.s32 %v662, %v664
          %v666 = vrot.slane %v659, %v665
          %v668 = vadd.f32 %v647, %v666
          %669 = vst.msk [vmem:[%s646] ss:$8 sm:$0x3] %vm330, %v668
          %670 = vst.msk [vmem:[%s646] ss:$8 sm:$0x0] %vm330, %v668
        $region48: #{tpu_custom_call.1} parent=27 // pred_fallthru
          _
        // Predicated region
        $region49: #{tpu_custom_call.1} parent=27 // pred_check
          _
        $region50: #{tpu_custom_call.1} parent=27 // pred_check_branch
          %672 = sbr.rel (%p237) target = $region52
        $region51: #{tpu_custom_call.1} parent=27 // pred_region
          %v673 = vld [vmem:[#allocation2] ss:$8 sm:$0x3]
          %v675 = vlaneseq
          %v676 = vshrl.u32 %v675, 7
          %v677 = vsub.s32 0, %v676
          %v678 = vrot.slane %v673, %v677
          %v679 = vlaneseq
          %v680 = vshrl.u32 %v679, 7
          %v681 = vsub.s32 1, %v680
          %v682 = vrot.slane %v673, %v681
          %vm685 = vcmask 1040384
          %v686 = vsel %vm685, %v678, 0.0
          %vm687 = vcmask 581632
          %v688 = vsel %vm687, %v682, 0.0
          %v689 = vadd.f32 %v686, %v688
          %690 = vadd.xlane.f32.xlu0 %v689
          %v691 = vpop.xlane.xlu0 %690
          %v692 = vrot.slane %v691, 4
          %v693 = vadd.f32 %v691, %v692
          %v694 = vrot.slane %v693, 2
          %v695 = vadd.f32 %v693, %v694
          %v696 = vrot.slane %v695, 1
          %v697 = vadd.f32 %v695, %v696
          %s698 = vtos %v697
          %s699 = scalar_lea.smem %s231, 0 [#allocation9]
          %700 = sst [smem:[%s699]] %s698
          %s701 = scalar_lea.vmem [#allocation2], 1
          %v702 = vld [vmem:[%s701] ss:$8 sm:$0x3]
          %v704 = vlaneseq
          %v705 = vshrl.u32 %v704, 7
          %v706 = vsub.s32 0, %v705
          %v707 = vrot.slane %v702, %v706
          %v708 = vlaneseq
          %v709 = vshrl.u32 %v708, 7
          %v710 = vsub.s32 1, %v709
          %v711 = vrot.slane %v702, %v710
          %v714 = vsel %vm685, %v707, 0.0
          %v715 = vsel %vm687, %v711, 0.0
          %v716 = vadd.f32 %v714, %v715
          %717 = vadd.xlane.f32.xlu0 %v716
          %v718 = vpop.xlane.xlu0 %717
          %v719 = vrot.slane %v718, 4
          %v720 = vadd.f32 %v718, %v719
          %v721 = vrot.slane %v720, 2
          %v722 = vadd.f32 %v720, %v721
          %v723 = vrot.slane %v722, 1
          %v724 = vadd.f32 %v722, %v723
          %s725 = vtos %v724
          %s726 = scalar_lea.smem %s231, 1 [#allocation9]
          %727 = sst [smem:[%s726]] %s725
          %s728 = scalar_lea.vmem [#allocation2], 2
          %v729 = vld [vmem:[%s728] ss:$8 sm:$0x3]
          %v731 = vlaneseq
          %v732 = vshrl.u32 %v731, 7
          %v733 = vsub.s32 0, %v732
          %v734 = vrot.slane %v729, %v733
          %v735 = vlaneseq
          %v736 = vshrl.u32 %v735, 7
          %v737 = vsub.s32 1, %v736
          %v738 = vrot.slane %v729, %v737
          %v741 = vsel %vm685, %v734, 0.0
          %v742 = vsel %vm687, %v738, 0.0
          %v743 = vadd.f32 %v741, %v742
          %744 = vadd.xlane.f32.xlu0 %v743
          %v745 = vpop.xlane.xlu0 %744
          %v746 = vrot.slane %v745, 4
          %v747 = vadd.f32 %v745, %v746
          %v748 = vrot.slane %v747, 2
          %v749 = vadd.f32 %v747, %v748
          %v750 = vrot.slane %v749, 1
          %v751 = vadd.f32 %v749, %v750
          %s752 = vtos %v751
          %s753 = scalar_lea.smem %s231, 2 [#allocation9]
          %754 = sst [smem:[%s753]] %s752
        $region52: #{tpu_custom_call.1} parent=27 // pred_fallthru
          _
        %s755 = sand.u32 %s107, 1
        %s756 = scalar_lea.sflag [#allocation6], %s755
        %s757 = sand.u32 %s107, 1
        %s758 = smul.addr %s757, 128
        %s759 = scalar_lea.smem [#allocation9], %s758
        // Predicated region
        $region53: #{tpu_custom_call.1} parent=27 // pred_check
          %p760 = pneg %p117
        $region54: #{tpu_custom_call.1} parent=27 // pred_check_branch
          %762 = sbr.rel (%p760) target = $region56
        $region55: #{tpu_custom_call.1} parent=27 // pred_region
          %s764 = ssub.s32 16, 16
          %765 = vsyncadd %s756, %s764
          %s766 = smul.addr %s27, 16
          %s767 = scalar_lea.hbm %s2, %s766
          %770 = dma.smem_to_hbm %s759, 16, %s767, %s756
        $region56: #{tpu_custom_call.1} parent=27 // pred_fallthru
          _
      $region28: #{tpu_custom_call.1} parent=5 // pred_fallthru
        _
      %p771 = scmp.le.s32.totalorder 2, %s17
      // Predicated region
      $region57: #{tpu_custom_call.1} parent=5 // pred_check
        %p772 = pneg %p771
      $region58: #{tpu_custom_call.1} parent=5 // pred_check_branch
        %774 = sbr.rel (%p772) target = $region60
      $region59: #{tpu_custom_call.1} parent=5 // pred_region
        %s775 = ssub.s32 %s17, 2
        // Predicated region
        $region61: #{tpu_custom_call.1} parent=59 // pred_check
          %p776 = pneg %p123
        $region62: #{tpu_custom_call.1} parent=59 // pred_check_branch
          %778 = sbr.rel (%p776) target = $region64
        $region63: #{tpu_custom_call.1} parent=59 // pred_region
          %s779 = sand.u32 %s108, 1
          %s780 = scalar_lea.sflag [#allocation6], %s779
          %s781 = sand.u32 %s108, 1
          %s782 = smul.addr %s781, 128
          %s783 = scalar_lea.smem [#allocation9], %s782
          %784 = dma.done %s780, 16
        $region64: #{tpu_custom_call.1} parent=59 // pred_fallthru
          _
        %785 = sfence
      $region60: #{tpu_custom_call.1} parent=5 // pred_fallthru
        _
    $region6: #{tpu_custom_call.1} parent=1 // loop_footer
      %s21 = sadd.s32 1, %s17
    $region7: #{tpu_custom_call.1} parent=1 // loop_footer_branch
      %16 = sbr.rel target = $region3
    $region8: #{tpu_custom_call.1} parent=1 // loop_exit
      _
    %786 = vsyncpa [#allocation5], 1
    %s787 = scalar_lea.sflag [#allocation5], 1
    %788 = vsyncpa %s787, 1
    %789 = vsyncpa [#allocation8], 1
    %s790 = scalar_lea.sflag [#allocation8], 1
    %791 = vsyncpa %s790, 1
    %792 = vsyncpa [#allocation6], 1
    %s793 = scalar_lea.sflag [#allocation6], 1
    %794 = vsyncpa %s793, 1

</llo_original>
